<compile_context>
chip_gen: v7x
topology: tpu7x:2x2x1
jax: 0.10.0
libtpu: 0.0.40
codegen_flags: <defaults>
</compile_context>

<pallas_src>
import jax
import jax.numpy as jnp
from jax.experimental import pallas as pl
from jax.experimental.pallas import tpu as pltpu


def _hsigmoid_kernel(x_ref, o_ref):
    # Upcast to f32: the kernel is HBM-bound with huge VPU slack, and f32
    # compute matches the PyTorch f32 formula (relu6(1.2x+3)/6) closely.
    x = x_ref[...].astype(jnp.float32)
    y = jnp.clip(x * 1.2 + 3.0, 0.0, 6.0) / 6.0
    o_ref[...] = y.astype(o_ref.dtype)


def hsigmoid(x: jax.Array, *, block_bytes: int = 8 * 1024 * 1024,
             donate_input: bool = False) -> jax.Array:
    """Elementwise hard-sigmoid matching the PyTorch Hsigmoid module.

    Accepts any floating shape/dtype; layout-agnostic (NCHW in the tests).
    """
    orig_shape = x.shape
    dtype = x.dtype
    n = x.size
    if n == 0:
        return x
    itemsize = jnp.dtype(dtype).itemsize

    # Cap block size: v7x has only 64 MiB VMEM per TensorCore; keep
    # 4 x block (double-buffered in + out) comfortably under ~48 MiB.
    block_bytes = max(1 << 20, min(block_bytes, 10 << 20))

    # Native sublane packing: f32 -> 8 rows, bf16/f16 -> 16, int8/fp8 -> 32.
    packing = 8 * max(1, 4 // itemsize)

    flat = x.reshape(-1)

    # Only require 128-lane alignment; ragged row counts are handled by
    # Pallas's masked edge blocks, so no pad/slice pass is needed for any
    # size that is a multiple of 128 (the common case for conv maps).
    n_pad = (-n) % 128
    if n_pad:
        # TODO(synk): handle the sub-128-element ragged tail in-kernel with a
        # masked store to avoid this extra pad/slice HBM pass.
        flat = jnp.pad(flat, (0, n_pad))
    total = flat.size

    # Fixed, small set of lane widths (contiguous DMA regardless; >=128 lanes
    # keeps stores unmasked).
    lanes = 512 if total % 512 == 0 else (256 if total % 256 == 0 else 128)
    rows = total // lanes
    x2d = flat.reshape(rows, lanes)

    # Row tiling: ~block_bytes per block, but always an even number of blocks
    # (>= 2) when the row count allows, so the "parallel" grid axis shards
    # across both TensorCores on v7x-class parts.
    if rows <= packing:
        row_tile = rows                      # single (possibly tiny) block
    else:
        total_bytes = total * itemsize
        nblocks = max(2, -(-total_bytes // block_bytes))
        nblocks += nblocks % 2               # even number of blocks
        row_tile = -(-rows // nblocks)
        row_tile = -(-row_tile // packing) * packing      # round up to packing
        row_tile = min(row_tile, -(-rows // packing) * packing)
    grid = (pl.cdiv(rows, row_tile),)

    # Explicit VMEM budget: in + out, double-buffered, plus headroom.
    block_actual = row_tile * lanes * itemsize
    vmem_limit = min(4 * block_actual + (2 << 20), 48 << 20)

    out2d = pl.pallas_call(
        _hsigmoid_kernel,
        out_shape=jax.ShapeDtypeStruct((rows, lanes), dtype),
        grid_spec=pltpu.PrefetchScalarGridSpec(
            num_scalar_prefetch=0,
            grid=grid,
            in_specs=[pl.BlockSpec((row_tile, lanes), lambda i: (i, 0))],
            out_specs=pl.BlockSpec((row_tile, lanes), lambda i: (i, 0)),
        ),
        compiler_params=pltpu.CompilerParams(
            dimension_semantics=("parallel",),
            vmem_limit_bytes=vmem_limit,
        ),
        cost_estimate=pl.CostEstimate(
            flops=5 * n,
            transcendentals=0,
            bytes_accessed=2 * n * itemsize,
        ),
        input_output_aliases=({0: 0} if donate_input else {}),
    )(x2d)

    out_flat = out2d.reshape(-1)
    if n_pad:
        out_flat = out_flat[:n]
    return out_flat.reshape(orig_shape)


def _hsigmoid_ref(x):
    # Original (unfolded) formula, as in the PyTorch module, in f32.
    xf = x.astype(jnp.float32)
    return jnp.clip(1.2 * xf + 3.0, 0.0, 6.0) / 6.0


if __name__ == "__main__":
    key = jax.random.PRNGKey(0)

    # 1) NCHW f32, 1024-aligned element count (common conv activation map).
    x = jax.random.normal(key, (2, 4, 16, 16), dtype=jnp.float32) * 4.0
    out = jax.block_until_ready(hsigmoid(x))
    ref = _hsigmoid_ref(x)
    assert out.shape == x.shape and out.dtype == x.dtype
    assert jnp.allclose(out, ref, atol=1e-6, rtol=1e-6), "f32 mismatch"

    # 2) 128-aligned but not 1024-aligned size -> ragged last row-block,
    #    no pad/slice path exercised.
    k2 = jax.random.fold_in(key, 1)
    x2 = jax.random.normal(k2, (3, 5, 8, 16), dtype=jnp.float32) * 4.0
    out2 = jax.block_until_ready(hsigmoid(x2))
    assert jnp.allclose(out2, _hsigmoid_ref(x2), atol=1e-6, rtol=1e-6), \
        "ragged-block mismatch"

    # 3) bf16 input (16-row sublane packing; kernel computes in f32).
    k3 = jax.random.fold_in(key, 2)
    x3 = (jax.random.normal(k3, (2, 4, 16, 16), dtype=jnp.float32) * 4.0
          ).astype(jnp.bfloat16)
    out3 = jax.block_until_ready(hsigmoid(x3))
    assert out3.dtype == jnp.bfloat16
    assert jnp.allclose(out3.astype(jnp.float32), _hsigmoid_ref(x3),
                        atol=8e-3, rtol=8e-3), "bf16 mismatch"

    print("KERNEL_OK")
</pallas_src>

<mosaic_0001>
module attributes {stable_mosaic.version = 11 : i64} {
  func.func @_hsigmoid_kernel(%arg0: i32, %arg1: memref<4x512xf32, #tpu.memory_space<vmem>>, %arg2: memref<4x512xf32, #tpu.memory_space<vmem>>) attributes {dimension_semantics = [#tpu.dimension_semantics<parallel>], iteration_bounds = array<i64: 1>, scalar_prefetch = 0 : i64, scratch_operands = 0 : i64, tpu.core_type = #tpu.core_type<tc>, window_params = [{transform_indices = @transform_0, window_bounds = array<i64: 4, 512>}, {transform_indices = @transform_1, window_bounds = array<i64: 4, 512>}]} {
    %c0 = arith.constant 0 : index
    %c0_0 = arith.constant 0 : index
    %0 = vector.load %arg1[%c0, %c0_0] : memref<4x512xf32, #tpu.memory_space<vmem>>, vector<4x512xf32>
    %cst = arith.constant 1.200000e+00 : f32
    %1 = vector.broadcast %cst : f32 to vector<4x512xf32>
    %2 = arith.mulf %0, %1 : vector<4x512xf32>
    %cst_1 = arith.constant 3.000000e+00 : f32
    %3 = vector.broadcast %cst_1 : f32 to vector<4x512xf32>
    %4 = arith.addf %2, %3 : vector<4x512xf32>
    %cst_2 = arith.constant 0.000000e+00 : f32
    %cst_3 = arith.constant 6.000000e+00 : f32
    %5 = vector.broadcast %cst_2 : f32 to vector<4x512xf32>
    %6 = arith.maximumf %5, %4 : vector<4x512xf32>
    %7 = vector.broadcast %cst_3 : f32 to vector<4x512xf32>
    %8 = arith.minimumf %7, %6 : vector<4x512xf32>
    %cst_4 = arith.constant 6.000000e+00 : f32
    %9 = vector.broadcast %cst_4 : f32 to vector<4x512xf32>
    %10 = arith.divf %8, %9 : vector<4x512xf32>
    %c0_5 = arith.constant 0 : index
    %c0_6 = arith.constant 0 : index
    %11 = vector.load %arg2[%c0_5, %c0_6] : memref<4x512xf32, #tpu.memory_space<vmem>>, vector<4x512xf32>
    tpu.vector_store %arg2[%c0_5, %c0_6], %10 {strides = array<i32>} : memref<4x512xf32, #tpu.memory_space<vmem>>, vector<4x512xf32>,
    return
  }
  func.func @transform_0(%arg0: i32) -> (i32, i32) {
    %c0_i32 = arith.constant 0 : i32
    %c0_i32_0 = arith.constant 0 : i32
    return %arg0, %c0_i32 : i32, i32
  }
  func.func @transform_1(%arg0: i32) -> (i32, i32) {
    %c0_i32 = arith.constant 0 : i32
    %c0_i32_0 = arith.constant 0 : i32
    return %arg0, %c0_i32 : i32, i32
  }
}

</mosaic_0001>

<llo_original>
// kernel: tpu_custom_call.1
$region0: #{tpu_custom_call.1}
  #allocation0 [shape = 'u32[]', space=smem, size = 0x4, offset = 0x4, fixed_abs, tag = 'smem constant byte address 0x4 - core index']
  #allocation1 [shape = 'u32[144,128]{1,0:T(1,128)}', space=vmem, size = 0x12000, scoped, tag = 'internal scratch']
  %s0 = inlined_call_operand.hbm [shape: f32[4,512], index: 0, kind: input, shape index: {}]
  %s1 = inlined_call_operand.hbm [shape: f32[4,512], index: 1, kind: output, shape index: {}]
  %s2 = sld [smem:[#allocation0]]
  $region18: #{tpu_custom_call.1} parent=0
    _
  %s4 = ssub.s32 1, %s2
  %s5 = scalar_select 0, %s4, %s2
  $region1: #{tpu_custom_call.1} parent=0
    #allocation2 [shape = 'u8[8192]{0}', space=vmem, size = 0x2000, scoped, tag = 'input window, operand 0, single buffered']
    #allocation3 [shape = 's32[1]{0}', space=sflag, size = 0x4, scoped, tag = 'scoped memory for tpu_custom_call.1']
    #allocation4 [shape = 's32[1]{0}', space=sflag, size = 0x4, scoped, tag = 'scoped memory for tpu_custom_call.1']
    #allocation5 [shape = 'u8[8192]{0}', space=vmem, size = 0x2000, scoped, tag = 'output window, operand 0, single buffered']
    %6 = vsyncpa [#allocation3], 0
    %7 = vsyncpa [#allocation4], 0
    // Predicated region
    $region2: #{tpu_custom_call.1} parent=1 // pred_check
      _
    $region3: #{tpu_custom_call.1} parent=1 // pred_check_branch
      %9 = sbr.rel (0) target = $region5
    $region4: #{tpu_custom_call.1} parent=1 // pred_region
      %s11 = ssub.s32 256, 256
      %12 = vsyncadd [#allocation3], %s11
      %s14 = sshll.u32 [#allocation2], 4
      %s15 = int_to_ptr.vmem [resolvable:$true] %s14
      %17 = dma.hbm_to_vmem [thread:$0]  %s0, 256, %s15, [#allocation3]
    $region5: #{tpu_custom_call.1} parent=1 // pred_fallthru
      _
    // Predicated region
    $region6: #{tpu_custom_call.1} parent=1 // pred_check
      _
    $region7: #{tpu_custom_call.1} parent=1 // pred_check_branch
      %19 = sbr.rel (0) target = $region9
    $region8: #{tpu_custom_call.1} parent=1 // pred_region
      %20 = dma.done [#allocation3], 256
    $region9: #{tpu_custom_call.1} parent=1 // pred_fallthru
      _
    %v21 = vld [vmem:[#allocation2] sm:$0xff]
    %v22 = vld [vmem:[#allocation2 + $0x8] sm:$0xff]
    %v23 = vmul.f32 %v21, 1.2
    %v24 = vmul.f32 %v22, 1.2
    %v25 = vadd.f32 %v23, 3.0
    %v26 = vadd.f32 %v24, 3.0
    %v27 = vmax.f32 %v25, 0.0
    %v28 = vmax.f32 %v26, 0.0
    %v29 = vmin.f32 %v27, 6.0
    %v30 = vmin.f32 %v28, 6.0
    %v31 = vrcp.pop 6.0
    %v32 = vmul.f32 %v29, %v31
    %v33 = vmul.f32 %v30, %v31
    %34 = vst [vmem:[#allocation5] sm:$0xff] %v32
    %35 = vst [vmem:[#allocation5 + $0x8] sm:$0xff] %v33
    // Predicated region
    $region10: #{tpu_custom_call.1} parent=1 // pred_check
      _
    $region11: #{tpu_custom_call.1} parent=1 // pred_check_branch
      %37 = sbr.rel (0) target = $region13
    $region12: #{tpu_custom_call.1} parent=1 // pred_region
      %s39 = ssub.s32 256, 256
      %40 = vsyncadd [#allocation4], %s39
      %s42 = sshll.u32 [#allocation5], 4
      %s43 = int_to_ptr.vmem [resolvable:$true] %s42
      %45 = dma.vmem_to_hbm [thread:$0]  %s43, 256, %s1, [#allocation4]
    $region13: #{tpu_custom_call.1} parent=1 // pred_fallthru
      _
    // Predicated region
    $region14: #{tpu_custom_call.1} parent=1 // pred_check
      _
    $region15: #{tpu_custom_call.1} parent=1 // pred_check_branch
      %47 = sbr.rel (0) target = $region17
    $region16: #{tpu_custom_call.1} parent=1 // pred_region
      %48 = dma.done [#allocation4], 256
    $region17: #{tpu_custom_call.1} parent=1 // pred_fallthru
      _
    %49 = vsyncpa [#allocation3], 1
    %50 = vsyncpa [#allocation4], 1

</llo_original>
